<compile_context>
chip_gen: v7x
topology: tpu7x:2x2x1
jax: 0.10.0
libtpu: 0.0.40
codegen_flags: <defaults>
</compile_context>

<pallas_src>
import functools

import jax
import jax.numpy as jnp
from jax.experimental import pallas as pl
from jax.experimental.pallas import tpu as pltpu

_TARGET_TILE_BYTES = 2 << 20  # ~2 MiB per tile; 4 buffers in flight ~= 8 MiB.


def _identity_copy_kernel(sig_ref, out_ref):
    # Straight full-tile copy (placeholder for future fused preprocessing).
    out_ref[...] = sig_ref[...]


def _choose_block_rows(rows: int, row_bytes: int) -> int:
    """Rows per block: multiple of 8, ~2 MiB, >=2 grid steps when possible."""
    if rows <= 8:
        return rows                      # full row extent (exempt from /8 rule)
    br = max(8, (_TARGET_TILE_BYTES // max(row_bytes, 1)) // 8 * 8)
    if rows >= 16:
        # At least two grid steps -> both v7x TensorCores get work and the
        # input/output DMAs can overlap across steps.
        half = (((rows + 1) // 2) + 7) // 8 * 8
        br = min(br, half)
    if br >= rows:
        return rows                      # single full-extent block
    return br


@functools.partial(jax.jit, static_argnames=("freq",))
def _ecg_preprocess_pallas(sig: jnp.ndarray, freq: int = 500) -> jnp.ndarray:
    """Identity preprocessing routed through a Pallas boundary (no pad/slice)."""
    del freq  # stored-but-unused in the reference module
    if sig.ndim == 0:
        return sig

    orig_shape = sig.shape
    last = orig_shape[-1]
    rows = max(1, sig.size // max(last, 1))
    x2d = sig.reshape(rows, last)        # free metadata reshape, no padding

    row_bytes = last * x2d.dtype.itemsize
    block_rows = _choose_block_rows(rows, row_bytes)
    grid = (pl.cdiv(rows, block_rows),)

    out2d = pl.pallas_call(
        _identity_copy_kernel,
        out_shape=jax.ShapeDtypeStruct((rows, last), sig.dtype),
        grid=grid,
        in_specs=[pl.BlockSpec((block_rows, last), lambda r: (r, 0))],
        out_specs=pl.BlockSpec((block_rows, last), lambda r: (r, 0)),
        compiler_params=pltpu.CompilerParams(
            dimension_semantics=("parallel",)
        ),
    )(x2d)

    return out2d.reshape(orig_shape)


def ecg_preprocess(sig: jnp.ndarray, freq: int = 500, use_pallas: bool = False):
    """Matches EcgPreprocessor.forward (identity).

    Fast path (default): return `sig` directly -- zero HBM traffic.
    `use_pallas=True` keeps a Pallas boundary for composition / future fusion.
    """
    if not use_pallas:
        return sig
    return _ecg_preprocess_pallas(sig, freq=freq)


if __name__ == "__main__":
    key = jax.random.PRNGKey(0)
    k1, k2, k3 = jax.random.split(key, 3)

    # Small ECG-like input: batch=2, 4 leads, 128 time samples.
    sig = jax.random.normal(k1, (2, 4, 128), dtype=jnp.float32)

    # Default fast path: identity with zero cost.
    out_fast = ecg_preprocess(sig, freq=500)
    assert out_fast.shape == sig.shape and out_fast.dtype == sig.dtype
    assert bool(jnp.array_equal(out_fast, sig))

    # Pallas path: single (8, 128) lane-aligned block.
    out_pl = jax.block_until_ready(ecg_preprocess(sig, freq=500, use_pallas=True))
    assert out_pl.shape == sig.shape and out_pl.dtype == sig.dtype
    assert bool(jnp.array_equal(out_pl, sig))

    # T not a multiple of 128: full-extent last dim -> no pad/unpad needed.
    sig2 = jax.random.normal(k2, (2, 3, 100), dtype=jnp.float32)
    out2 = jax.block_until_ready(ecg_preprocess(sig2, freq=250, use_pallas=True))
    assert out2.shape == sig2.shape and bool(jnp.array_equal(out2, sig2))

    # Larger slab: rows=64 -> 2 parallel grid steps (exercises multi-block path).
    sig3 = jax.random.normal(k3, (8, 8, 1000), dtype=jnp.float32)
    out3 = jax.block_until_ready(ecg_preprocess(sig3, freq=500, use_pallas=True))
    assert out3.shape == sig3.shape and bool(jnp.array_equal(out3, sig3))

    print("KERNEL_OK")
</pallas_src>

<mosaic_0001>
module attributes {stable_mosaic.version = 11 : i64} {
  func.func @_identity_copy_kernel(%arg0: i32, %arg1: memref<8x128xf32, #tpu.memory_space<vmem>>, %arg2: memref<8x128xf32, #tpu.memory_space<vmem>>) attributes {dimension_semantics = [#tpu.dimension_semantics<parallel>], iteration_bounds = array<i64: 1>, scalar_prefetch = 0 : i64, scratch_operands = 0 : i64, tpu.core_type = #tpu.core_type<tc>, window_params = [{transform_indices = @transform_0, window_bounds = array<i64: 8, 128>}, {transform_indices = @transform_1, window_bounds = array<i64: 8, 128>}]} {
    %c0 = arith.constant 0 : index
    %c0_0 = arith.constant 0 : index
    %0 = vector.load %arg1[%c0, %c0_0] : memref<8x128xf32, #tpu.memory_space<vmem>>, vector<8x128xf32>
    %c0_1 = arith.constant 0 : index
    %c0_2 = arith.constant 0 : index
    %1 = vector.load %arg2[%c0_1, %c0_2] : memref<8x128xf32, #tpu.memory_space<vmem>>, vector<8x128xf32>
    tpu.vector_store %arg2[%c0_1, %c0_2], %0 {strides = array<i32>} : memref<8x128xf32, #tpu.memory_space<vmem>>, vector<8x128xf32>,
    return
  }
  func.func @transform_0(%arg0: i32) -> (i32, i32) {
    %c0_i32 = arith.constant 0 : i32
    %c0_i32_0 = arith.constant 0 : i32
    return %arg0, %c0_i32 : i32, i32
  }
  func.func @transform_1(%arg0: i32) -> (i32, i32) {
    %c0_i32 = arith.constant 0 : i32
    %c0_i32_0 = arith.constant 0 : i32
    return %arg0, %c0_i32 : i32, i32
  }
}

</mosaic_0001>

<llo_original>
// kernel: _ecg_preprocess_pallas.1
$region0: #{_ecg_preprocess_pallas.1}
  #allocation0 [shape = 'u32[]', space=smem, size = 0x4, offset = 0x4, fixed_abs, tag = 'smem constant byte address 0x4 - core index']
  #allocation1 [shape = 'u32[144,128]{1,0:T(1,128)}', space=vmem, size = 0x12000, scoped, tag = 'internal scratch']
  %s0 = inlined_call_operand.hbm [shape: f32[8,128], index: 0, kind: input, shape index: {}]
  %s1 = inlined_call_operand.hbm [shape: f32[8,128], index: 1, kind: output, shape index: {}]
  %s2 = sld [smem:[#allocation0]]
  $region18: #{_ecg_preprocess_pallas.1} parent=0
    _
  %s4 = ssub.s32 1, %s2
  %s5 = scalar_select 0, %s4, %s2
  $region1: #{_ecg_preprocess_pallas.1} parent=0
    #allocation2 [shape = 'u8[4096]{0}', space=vmem, size = 0x1000, scoped, tag = 'input window, operand 0, single buffered']
    #allocation3 [shape = 's32[1]{0}', space=sflag, size = 0x4, scoped, tag = 'scoped memory for _ecg_preprocess_pallas.1']
    #allocation4 [shape = 's32[1]{0}', space=sflag, size = 0x4, scoped, tag = 'scoped memory for _ecg_preprocess_pallas.1']
    #allocation5 [shape = 'u8[4096]{0}', space=vmem, size = 0x1000, scoped, tag = 'output window, operand 0, single buffered']
    %6 = vsyncpa [#allocation3], 0
    %7 = vsyncpa [#allocation4], 0
    // Predicated region
    $region2: #{_ecg_preprocess_pallas.1} parent=1 // pred_check
      _
    $region3: #{_ecg_preprocess_pallas.1} parent=1 // pred_check_branch
      %9 = sbr.rel (0) target = $region5
    $region4: #{_ecg_preprocess_pallas.1} parent=1 // pred_region
      %s11 = ssub.s32 128, 128
      %12 = vsyncadd [#allocation3], %s11
      %s14 = sshll.u32 [#allocation2], 4
      %s15 = int_to_ptr.vmem [resolvable:$true] %s14
      %17 = dma.hbm_to_vmem [thread:$0]  %s0, 128, %s15, [#allocation3]
    $region5: #{_ecg_preprocess_pallas.1} parent=1 // pred_fallthru
      _
    // Predicated region
    $region6: #{_ecg_preprocess_pallas.1} parent=1 // pred_check
      _
    $region7: #{_ecg_preprocess_pallas.1} parent=1 // pred_check_branch
      %19 = sbr.rel (0) target = $region9
    $region8: #{_ecg_preprocess_pallas.1} parent=1 // pred_region
      %20 = dma.done [#allocation3], 128
    $region9: #{_ecg_preprocess_pallas.1} parent=1 // pred_fallthru
      _
    %v21 = vld [vmem:[#allocation2] sm:$0xff]
    %22 = vst [vmem:[#allocation5] sm:$0xff] %v21
    // Predicated region
    $region10: #{_ecg_preprocess_pallas.1} parent=1 // pred_check
      _
    $region11: #{_ecg_preprocess_pallas.1} parent=1 // pred_check_branch
      %24 = sbr.rel (0) target = $region13
    $region12: #{_ecg_preprocess_pallas.1} parent=1 // pred_region
      %s26 = ssub.s32 128, 128
      %27 = vsyncadd [#allocation4], %s26
      %s29 = sshll.u32 [#allocation5], 4
      %s30 = int_to_ptr.vmem [resolvable:$true] %s29
      %32 = dma.vmem_to_hbm [thread:$0]  %s30, 128, %s1, [#allocation4]
    $region13: #{_ecg_preprocess_pallas.1} parent=1 // pred_fallthru
      _
    // Predicated region
    $region14: #{_ecg_preprocess_pallas.1} parent=1 // pred_check
      _
    $region15: #{_ecg_preprocess_pallas.1} parent=1 // pred_check_branch
      %34 = sbr.rel (0) target = $region17
    $region16: #{_ecg_preprocess_pallas.1} parent=1 // pred_region
      %35 = dma.done [#allocation4], 128
    $region17: #{_ecg_preprocess_pallas.1} parent=1 // pred_fallthru
      _
    %36 = vsyncpa [#allocation3], 1
    %37 = vsyncpa [#allocation4], 1

</llo_original>
